<compile_context>
chip_gen: v7x
topology: tpu7x:2x2x1
jax: 0.10.0
libtpu: 0.0.40
codegen_flags: <defaults>
</compile_context>

<pallas_src>
import functools

import jax
import jax.numpy as jnp
from jax.experimental import pallas as pl
from jax.experimental.pallas import tpu as pltpu


GROWTH = 48
BN_SIZE = 4
BLOCK_CONFIG = (6, 12, 36, 24)
INIT_FEATURES = 96
INNER = BN_SIZE * GROWTH          # 192: bottleneck width of every dense layer
INNER_P = 256                     # 192 padded to the next lane multiple
COUT_P = 128                      # 48 conv2 output channels padded for lane-dense stores
VMEM_LIMIT = 32 << 20             # explicit scoped-VMEM limit (safe on v5e/v6e/v7x)
TILE_BUDGET = 16 << 20            # double-buffered tile footprint budget for the matmuls


def _round_up(x, m):
    return ((x + m - 1) // m) * m


def _padded_rows(m):
    """Rows fed to the fused matmul: multiple of 8; if large, guaranteed to have an M-tile
    divisor in [128, 512] so we never fall back to tiny M tiles (idempotent)."""
    mp = _round_up(max(m, 8), 8)
    if mp > 512 and not any(mp % t == 0 for t in range(128, 513, 8)):
        mp = _round_up(mp, 128)
    return mp


def _pick_tm(mp):
    if mp <= 256:
        return mp
    if mp <= 512:
        # split only when each half still fills a 256-row MXU pass (v7x dual-TC); never 64-row
        return 256 if mp % 256 == 0 else mp
    return max(t for t in range(128, 513, 8) if mp % t == 0)


def _pick_tiles(mp, kp, np_, out_itemsize):
    tm = _pick_tm(mp)

    def footprint(tn, tk):
        tiles = 2 * (tm * tk * 2 + tk * tn * 2 + tm * tn * out_itemsize)  # double-buffered
        if tk < kp:
            tiles += tm * tn * 4                                          # f32 acc scratch
        return tiles

    tk_cands = [kp] + [d for d in (1024, 768, 512, 384, 256, 128) if d < kp and kp % d == 0]
    tn_cands = [np_] + [d for d in (512, 384, 256, 128) if d < np_ and np_ % d == 0]
    for tk in tk_cands:           # prefer a single K step (no scratch, fewest grid steps)
        for tn in tn_cands:       # prefer whole-N (input prologue applied once per A tile)
            if footprint(tn, tk) <= TILE_BUDGET:
                return tm, tn, tk
    return tm, 128, 128


# ----------------------- fused (BN+ReLU) -> matmul -> (BN+ReLU) kernel -----------------------

def _make_mm_kernel(in_relu, out_relu_affine, single_k):
    """O = epilogue( prologue(A) @ B ); bf16 MXU operands, f32 accumulation.
    prologue  (in_relu)        : relu(A * si + bi)   -- folded eval-mode BN + ReLU on inputs
    epilogue  (out_relu_affine): relu(acc * so + bo) -- folded eval-mode BN + ReLU on outputs
    Unused scale/shift operands are not passed at all (no dead DMAs)."""

    def kernel(*refs):
        idx = 0
        si_ref = bi_ref = so_ref = bo_ref = None
        if in_relu:
            si_ref, bi_ref = refs[0], refs[1]
            idx = 2
        if out_relu_affine:
            so_ref, bo_ref = refs[idx], refs[idx + 1]
            idx += 2
        a_ref, b_ref, o_ref = refs[idx], refs[idx + 1], refs[idx + 2]

        a = a_ref[...]
        if in_relu:
            a = jnp.maximum(a.astype(jnp.float32) * si_ref[...] + bi_ref[...], 0.0)
            a = a.astype(jnp.bfloat16)

        def epilogue(r):
            if out_relu_affine:
                r = jnp.maximum(r * so_ref[...] + bo_ref[...], 0.0)
            return r.astype(o_ref.dtype)

        if single_k:
            o_ref[...] = epilogue(jnp.dot(a, b_ref[...], preferred_element_type=jnp.float32))
        else:
            acc_ref = refs[idx + 3]
            k = pl.program_id(2)

            @pl.when(k == 0)
            def _init():
                acc_ref[...] = jnp.zeros_like(acc_ref)

            acc_ref[...] += jnp.dot(a, b_ref[...], preferred_element_type=jnp.float32)

            @pl.when(k == pl.num_programs(2) - 1)
            def _finish():
                o_ref[...] = epilogue(acc_ref[...])

    return kernel


@functools.partial(jax.jit, static_argnames=("in_relu", "out_relu_affine", "out_dtype"))
def _fused_matmul_padded(a, b, si, bi, so, bo, *, in_relu, out_relu_affine, out_dtype):
    mp, kp = a.shape
    _, np_ = b.shape
    odtype = jnp.dtype(out_dtype)
    tm, tn, tk = _pick_tiles(mp, kp, np_, odtype.itemsize)
    nk = kp // tk
    single_k = nk == 1
    grid = (mp // tm, np_ // tn, nk)

    operands, in_specs = [], []
    if in_relu:
        operands += [si, bi]
        in_specs += [pl.BlockSpec((1, tk), lambda i, j, k: (0, k)),
                     pl.BlockSpec((1, tk), lambda i, j, k: (0, k))]
    if out_relu_affine:
        operands += [so, bo]
        in_specs += [pl.BlockSpec((1, tn), lambda i, j, k: (0, j)),
                     pl.BlockSpec((1, tn), lambda i, j, k: (0, j))]
    operands += [a, b]
    in_specs += [pl.BlockSpec((tm, tk), lambda i, j, k: (i, k)),    # A (bf16)
                 pl.BlockSpec((tk, tn), lambda i, j, k: (k, j))]    # B (bf16, pre-padded)
    scratch = [] if single_k else [pltpu.VMEM((tm, tn), jnp.float32)]

    cost = pl.CostEstimate(
        flops=2 * mp * np_ * kp, transcendentals=0,
        bytes_accessed=(mp * kp + kp * np_) * 2 + mp * np_ * odtype.itemsize)

    return pl.pallas_call(
        _make_mm_kernel(in_relu, out_relu_affine, single_k),
        out_shape=jax.ShapeDtypeStruct((mp, np_), odtype),
        grid_spec=pltpu.PrefetchScalarGridSpec(
            num_scalar_prefetch=0, grid=grid,
            in_specs=in_specs,
            out_specs=pl.BlockSpec((tm, tn), lambda i, j, k: (i, j)),
            scratch_shapes=scratch),
        compiler_params=pltpu.CompilerParams(
            dimension_semantics=("parallel", "parallel", "arbitrary"),
            vmem_limit_bytes=VMEM_LIMIT),
        cost_estimate=cost,
    )(*operands)


def fused_matmul(a, b_pad, si=None, bi=None, so=None, bo=None, *,
                 in_relu, out_relu_affine, out_dtype="bfloat16"):
    """(optional BN+ReLU) -> matmul -> (optional BN+ReLU).  b_pad / si / bi / so / bo are
    padded & cast at init; `a` only needs a copy when its shape isn't already padded."""
    m, k = a.shape
    kp, np_ = b_pad.shape
    mp = _padded_rows(m)
    a = a.astype(jnp.bfloat16)
    if (m, k) != (mp, kp):
        a = jnp.zeros((mp, kp), jnp.bfloat16).at[:m, :k].set(a)
    out = _fused_matmul_padded(a, b_pad, si, bi, so, bo, in_relu=in_relu,
                               out_relu_affine=out_relu_affine, out_dtype=out_dtype)
    return out if mp == m else out[:m]


# ----------------------- 3x3 conv: tiled grid, in-kernel 9-tap accumulation -----------------------

def _conv3x3_kernel(x_ref, w_ref, o_ref, *, tr, wp):
    # x_ref: (1, in_rows, Cin) bf16 -- one batch element's zero-padded image (resident across r)
    # w_ref: (9, Cin, COUT_P) bf16  -- tap t = dy*3 + dx
    # o_ref: (1, tr, COUT_P)        -- "extended" output rows; x >= w columns discarded outside
    base = pl.multiple_of(pl.program_id(1) * tr, 8)
    acc = jnp.zeros((tr, o_ref.shape[-1]), jnp.float32)
    for t in range(9):
        dy, dx = divmod(t, 3)
        a = x_ref[0, pl.ds(base + dy * wp + dx, tr), :]
        acc = acc + jnp.dot(a, w_ref[t], preferred_element_type=jnp.float32)
    o_ref[0] = acc.astype(o_ref.dtype)


@functools.partial(jax.jit, static_argnames=("h", "w", "tr"))
def _conv3x3_call(x3, w_taps, *, h, w, tr):
    n_batch, in_rows, cin = x3.shape
    cout = w_taps.shape[2]
    wp = w + 2
    out_rows = _round_up(h * wp, tr)
    cost = pl.CostEstimate(
        flops=2 * 9 * n_batch * out_rows * cin * cout, transcendentals=0,
        bytes_accessed=x3.size * 2 + w_taps.size * 2 + n_batch * out_rows * cout * 2)
    return pl.pallas_call(
        functools.partial(_conv3x3_kernel, tr=tr, wp=wp),
        out_shape=jax.ShapeDtypeStruct((n_batch, out_rows, cout), jnp.bfloat16),
        grid_spec=pltpu.PrefetchScalarGridSpec(
            num_scalar_prefetch=0, grid=(n_batch, out_rows // tr),
            in_specs=[pl.BlockSpec((1, in_rows, cin), lambda n, r: (n, 0, 0)),
                      pl.BlockSpec((9, cin, cout), lambda n, r: (0, 0, 0))],
            out_specs=pl.BlockSpec((1, tr, cout), lambda n, r: (n, r, 0))),
        compiler_params=pltpu.CompilerParams(
            dimension_semantics=("parallel", "parallel"),
            vmem_limit_bytes=VMEM_LIMIT),
        cost_estimate=cost,
    )(x3, w_taps)


def conv3x3_s1_p1(t2d, w_taps, n_batch, h, w):
    """3x3 stride-1 pad-1 conv of the bf16 bottleneck activations.  The 9 taps are accumulated
    inside the kernel straight from the zero-padded image resident in VMEM; the grid tiles
    (batch, row-blocks) so DMA is pipelined and both v7x TensorCores get work.
    Weight/padding invariant: cin rows >= 192 and cout cols >= 48 are zero."""
    cin = t2d.shape[1]
    wp = w + 2
    hw_ext = h * wp
    tr = min(128, _round_up(hw_ext, 8))
    out_rows = _round_up(hw_ext, tr)
    in_rows_needed = out_rows + 2 * wp + 2                 # max flattened row any tap reads
    pad_bottom = -(-in_rows_needed // wp) - (h + 1)        # >= 2: halo + slack in ONE bf16 pad
    x = t2d.reshape(n_batch, h, w, cin)
    x = jnp.pad(x, ((0, 0), (1, pad_bottom), (1, 1), (0, 0)))
    x3 = x.reshape(n_batch, (h + 1 + pad_bottom) * wp, cin)
    out = _conv3x3_call(x3, w_taps, h=h, w=w, tr=tr)
    out = out[:, :hw_ext, :].reshape(n_batch, h, wp, out.shape[-1])[:, :, :w, :GROWTH]
    return out.reshape(n_batch * h * w, GROWTH)


# ----------------------- norm5 affine + ReLU fused with global average pool -----------------------

def _norm5_gap_kernel(s_ref, b_ref, x_ref, o_ref, *, inv_hw):
    x = x_ref[0].astype(jnp.float32)
    y = jnp.maximum(x * s_ref[...] + b_ref[...], 0.0)
    o_ref[0] = jnp.sum(y, axis=0, keepdims=True) * inv_hw


@functools.partial(jax.jit, static_argnames=("hw",))
def _norm5_gap(s, b, x3, *, hw):
    n, _, cp = x3.shape
    out = pl.pallas_call(
        functools.partial(_norm5_gap_kernel, inv_hw=1.0 / hw),
        out_shape=jax.ShapeDtypeStruct((n, 1, cp), jnp.float32),
        grid_spec=pltpu.PrefetchScalarGridSpec(
            num_scalar_prefetch=0, grid=(n,),
            in_specs=[pl.BlockSpec((1, cp), lambda i: (0, 0)),
                      pl.BlockSpec((1, cp), lambda i: (0, 0)),
                      pl.BlockSpec((1, hw, cp), lambda i: (i, 0, 0))],
            out_specs=pl.BlockSpec((1, 1, cp), lambda i: (i, 0, 0))),
        compiler_params=pltpu.CompilerParams(
            dimension_semantics=("parallel",),
            vmem_limit_bytes=VMEM_LIMIT),
    )(s, b, x3)
    return out.reshape(n, cp)


# ----------------------- JAX glue (stem im2col / pooling) -----------------------

def _extract_patches(x, k, stride, pad):
    """im2col for the single 7x7 stem conv: NHWC (bf16) -> (N, Ho, Wo, k*k*C), cols = (dy, dx, c)."""
    n, h, w, c = x.shape
    xp = jnp.pad(x, ((0, 0), (pad, pad), (pad, pad), (0, 0)))
    ho = (h + 2 * pad - k) // stride + 1
    wo = (w + 2 * pad - k) // stride + 1
    cols = []
    for dy in range(k):
        for dx in range(k):
            cols.append(xp[:, dy:dy + stride * (ho - 1) + 1:stride,
                              dx:dx + stride * (wo - 1) + 1:stride, :])
    p = jnp.stack(cols, axis=3)
    return p.reshape(n, ho, wo, k * k * c)


def _maxpool_3x3_s2_p1(x):
    n, h, w, c = x.shape
    xp = jnp.pad(x, ((0, 0), (1, 1), (1, 1), (0, 0)), constant_values=-jnp.inf)
    ho = (h + 2 - 3) // 2 + 1
    wo = (w + 2 - 3) // 2 + 1
    out = None
    for dy in range(3):
        for dx in range(3):
            s = xp[:, dy:dy + 2 * (ho - 1) + 1:2, dx:dx + 2 * (wo - 1) + 1:2, :]
            out = s if out is None else jnp.maximum(out, s)
    return out


def _avgpool_2x2(x):
    n, h, w, c = x.shape
    return x.astype(jnp.float32).reshape(n, h // 2, 2, w // 2, 2, c).mean(axis=(2, 4))


# ----------------------- parameters (deterministic synthetic init, pre-padded bf16) -----------------------

def _conv_weight(key, k, cin, cout):
    fan_in = k * k * cin
    return jax.random.normal(key, (k, k, cin, cout), jnp.float32) * (2.0 / fan_in) ** 0.5


def _bn_affine(key, c, eps=1e-5):
    k1, k2, k3, k4 = jax.random.split(key, 4)
    gamma = jax.random.uniform(k1, (c,), jnp.float32, 0.8, 1.2)
    beta = 0.1 * jax.random.normal(k2, (c,), jnp.float32)
    running_mean = 0.1 * jax.random.normal(k3, (c,), jnp.float32)
    running_var = jax.random.uniform(k4, (c,), jnp.float32, 0.8, 1.2)
    scale = gamma / jnp.sqrt(running_var + eps)
    shift = beta - running_mean * scale
    return scale, shift


def _pad_mat(w, kp, np_):
    k, n = w.shape
    return jnp.zeros((kp, np_), jnp.bfloat16).at[:k, :n].set(w.astype(jnp.bfloat16))


def _pad_vec(v, cp):
    return jnp.zeros((1, cp), jnp.float32).at[0, :v.shape[0]].set(v)


def init_densenet161_params(key, out_size, mode="U-Ones"):
    """Synthetic eval-mode parameters, padded to lane multiples and cast to bf16 once so the
    forward pass never copies a weight just to pad it.  Zero-padding of weight rows/cols is a
    correctness invariant (padded channels must contribute 0)."""
    assert mode in ("U-Ones", "U-Zeros", "U-MultiClass")
    keys = iter(jax.random.split(key, 1024))
    P = {}

    w0 = _conv_weight(next(keys), 7, 3, INIT_FEATURES).reshape(49 * 3, INIT_FEATURES)
    P["conv0_w"] = _pad_mat(w0, _round_up(49 * 3, 128), _round_up(INIT_FEATURES, 128))
    s0, b0 = _bn_affine(next(keys), INIT_FEATURES)
    P["bn0_s"] = _pad_vec(s0, _round_up(INIT_FEATURES, 128))
    P["bn0_b"] = _pad_vec(b0, _round_up(INIT_FEATURES, 128))

    num_features = INIT_FEATURES
    for b, nlayers in enumerate(BLOCK_CONFIG):
        layers = []
        for l in range(nlayers):
            cin = num_features + l * GROWTH
            kp = _round_up(cin, 128)
            s1, b1 = _bn_affine(next(keys), cin)
            w1 = _conv_weight(next(keys), 1, cin, INNER).reshape(cin, INNER)
            s2, b2 = _bn_affine(next(keys), INNER)
            w2 = _conv_weight(next(keys), 3, INNER, GROWTH).reshape(9, INNER, GROWTH)
            w2p = jnp.zeros((9, INNER_P, COUT_P), jnp.bfloat16).at[:, :INNER, :GROWTH].set(
                w2.astype(jnp.bfloat16))
            layers.append(dict(
                s1=_pad_vec(s1, kp), b1=_pad_vec(b1, kp),
                w1=_pad_mat(w1, kp, INNER_P),
                s2=_pad_vec(s2, INNER_P), b2=_pad_vec(b2, INNER_P),
                w2=w2p))
        P[f"block{b}"] = layers
        num_features += nlayers * GROWTH
        if b != len(BLOCK_CONFIG) - 1:
            kp = _round_up(num_features, 128)
            cout = num_features // 2
            st, bt = _bn_affine(next(keys), num_features)
            wt = _conv_weight(next(keys), 1, num_features, cout).reshape(num_features, cout)
            P[f"trans{b}"] = dict(s=_pad_vec(st, kp), b=_pad_vec(bt, kp),
                                  w=_pad_mat(wt, kp, _round_up(cout, 128)))
            num_features = cout

    cp5 = _round_up(num_features, 128)                       # 2208 -> 2304
    s5, b5 = _bn_affine(next(keys), num_features)
    P["bn5_s"] = _pad_vec(s5, cp5)
    P["bn5_b"] = _pad_vec(b5, cp5)

    np_cls = _round_up(out_size, 128)
    if mode in ("U-Ones", "U-Zeros"):
        w = 0.01 * jax.random.normal(next(keys), (num_features, out_size), jnp.float32)
        P["cls_w"] = _pad_mat(w, cp5, np_cls)
        P["cls_b"] = jnp.zeros((out_size,), jnp.float32)     # nn.init.constant_(bias, 0)
    else:
        for name in ("lin0", "lin1", "linu"):
            w = 0.01 * jax.random.normal(next(keys), (num_features, out_size), jnp.float32)
            P[name + "_w"] = _pad_mat(w, cp5, np_cls)
            P[name + "_b"] = jnp.zeros((out_size,), jnp.float32)
    return P


# ----------------------- forward pass -----------------------

def densenet161_forward(x_nchw, P, mode="U-Ones"):
    """Returns (activations, out) exactly like the PyTorch module (drop_rate == 0 path)."""
    assert mode in ("U-Ones", "U-Zeros", "U-MultiClass")
    x = jnp.transpose(x_nchw, (0, 2, 3, 1)).astype(jnp.bfloat16)   # NCHW -> NHWC, bf16 once
    n = x.shape[0]

    # stem: conv0 (7x7 s2 p3, no bias) + norm0 + relu0 fused in one Pallas matmul, then pool0
    # TODO(synk): a stride-2 tap-accumulation stem kernel would avoid the 49x patch tensor.
    p = _extract_patches(x, 7, stride=2, pad=3)
    _, h, w, kc = p.shape
    y = fused_matmul(p.reshape(n * h * w, kc), P["conv0_w"],
                     so=P["bn0_s"], bo=P["bn0_b"],
                     in_relu=False, out_relu_affine=True, out_dtype="bfloat16")
    y = _maxpool_3x3_s2_p1(y.reshape(n, h, w, -1))
    _, h, w, _ = y.shape
    m = n * h * w
    cur2d = y.reshape(m, y.shape[-1])                 # (m, 128) bf16, cols >= 96 are zero

    num_features = INIT_FEATURES
    feat = None
    for b, nlayers in enumerate(BLOCK_CONFIG):
        # dense block b: 128-padded channel slab with padded row count (no per-layer re-pads)
        slab_width = _round_up(num_features + nlayers * GROWTH, 128)
        mp = _padded_rows(m)
        feat = jnp.zeros((mp, slab_width), jnp.bfloat16).at[:m, :cur2d.shape[1]].set(cur2d)
        for l in range(nlayers):
            c_cur = num_features + l * GROWTH
            kp = _round_up(c_cur, 128)
            lp = P[f"block{b}"][l]
            # norm1 + relu1 + conv1(1x1) + norm2 + relu2 fused into a single Pallas call (bf16 out)
            t = fused_matmul(feat[:, :kp], lp["w1"], si=lp["s1"], bi=lp["b1"],
                             so=lp["s2"], bo=lp["b2"],
                             in_relu=True, out_relu_affine=True, out_dtype="bfloat16")
            # conv2 (3x3 s1 p1, no bias): tiled, pipelined 9-tap accumulation, 128-lane output
            new = conv3x3_s1_p1(t[:m], lp["w2"], n, h, w)
            # TODO(synk): dropout on new_features for drop_rate > 0 not implemented (default 0).
            feat = feat.at[:m, c_cur:c_cur + GROWTH].set(new)
        num_features += nlayers * GROWTH

        if b != len(BLOCK_CONFIG) - 1:
            tp = P[f"trans{b}"]
            kp = _round_up(num_features, 128)
            tout = fused_matmul(feat[:, :kp], tp["w"], si=tp["s"], bi=tp["b"],
                                in_relu=True, out_relu_affine=False, out_dtype="bfloat16")
            npt = tout.shape[1]
            pooled = _avgpool_2x2(tout[:m].reshape(n, h, w, npt))
            h, w = h // 2, w // 2
            m = n * h * w
            num_features //= 2
            cur2d = pooled.reshape(m, npt).astype(jnp.bfloat16)

    # features end with norm5; the module applies F.relu + adaptive_avg_pool2d((1,1)):
    # fused into one kernel -- the full relu'd activation map never hits HBM.
    hw = h * w
    act_gap = _norm5_gap(P["bn5_s"], P["bn5_b"],
                         feat[:m].reshape(n, hw, feat.shape[1]), hw=hw)   # (n, 2304) f32
    activations = act_gap[:, :num_features]                               # (n, 2208)

    if mode in ("U-Ones", "U-Zeros"):
        o = fused_matmul(act_gap, P["cls_w"],
                         in_relu=False, out_relu_affine=False, out_dtype="float32")
        out = o[:, :P["cls_b"].shape[0]] + P["cls_b"]
    else:  # U-MultiClass
        outs = []
        for name in ("lin0", "lin1", "linu"):
            o = fused_matmul(act_gap, P[name + "_w"],
                             in_relu=False, out_relu_affine=False, out_dtype="float32")
            outs.append((o[:, :P[name + "_b"].shape[0]] + P[name + "_b"])[:, None, :])
        out = jnp.concatenate(outs, axis=1)                   # (n, 3, out_size)

    return activations, out


# ----------------------- main -----------------------

if __name__ == "__main__":
    key = jax.random.PRNGKey(0)
    out_size = 5
    mode = "U-Ones"

    params = init_densenet161_params(key, out_size, mode=mode)
    x = jax.random.normal(jax.random.fold_in(key, 999), (2, 3, 32, 32), jnp.float32)

    activations, out = densenet161_forward(x, params, mode=mode)
    activations, out = jax.block_until_ready((activations, out))

    assert activations.shape == (2, 2208), activations.shape
    assert out.shape == (2, out_size), out.shape
    assert bool(jnp.all(jnp.isfinite(activations))) and bool(jnp.all(jnp.isfinite(out)))
    print("KERNEL_OK")
</pallas_src>

<mosaic_0001>
module attributes {stable_mosaic.version = 11 : i64} {
  func.func @kernel(%arg0: i32, %arg1: i32, %arg2: i32, %arg3: memref<1x128xf32, #tpu.memory_space<vmem>>, %arg4: memref<1x128xf32, #tpu.memory_space<vmem>>, %arg5: memref<256x256xbf16, #tpu.memory_space<vmem>>, %arg6: memref<256x128xbf16, #tpu.memory_space<vmem>>, %arg7: memref<256x128xbf16, #tpu.memory_space<vmem>>) attributes {dimension_semantics = [#tpu.dimension_semantics<parallel>, #tpu.dimension_semantics<parallel>, #tpu.dimension_semantics<arbitrary>], iteration_bounds = array<i64: 2, 1, 1>, scalar_prefetch = 0 : i64, scratch_operands = 0 : i64, tpu.core_type = #tpu.core_type<tc>, window_params = [{transform_indices = @transform_0, window_bounds = array<i64: 1, 128>}, {transform_indices = @transform_1, window_bounds = array<i64: 1, 128>}, {transform_indices = @transform_2, window_bounds = array<i64: 256, 256>}, {transform_indices = @transform_3, window_bounds = array<i64: 256, 128>}, {transform_indices = @transform_4, window_bounds = array<i64: 256, 128>}]} {
    %c0 = arith.constant 0 : index
    %c0_0 = arith.constant 0 : index
    %0 = vector.load %arg5[%c0, %c0_0] : memref<256x256xbf16, #tpu.memory_space<vmem>>, vector<256x256xbf16>
    %c0_1 = arith.constant 0 : index
    %c0_2 = arith.constant 0 : index
    %1 = vector.load %arg6[%c0_1, %c0_2] : memref<256x128xbf16, #tpu.memory_space<vmem>>, vector<256x128xbf16>
    %cst = arith.constant dense<0.000000e+00> : vector<256x128xf32>
    %2 = tpu.matmul %0, %1, %cst {dimension_numbers = #tpu.dot_dimension_numbers<[1], [0], [0], [1], [0, 0, 1, 1], [], []>} : vector<256x256xbf16>, vector<256x128xbf16>, vector<256x128xf32> -> vector<256x128xf32>
    %c0_3 = arith.constant 0 : index
    %c0_4 = arith.constant 0 : index
    %3 = vector.load %arg3[%c0_3, %c0_4] : memref<1x128xf32, #tpu.memory_space<vmem>>, vector<1x128xf32>
    %4 = vector.broadcast %3 : vector<1x128xf32> to vector<256x128xf32>
    %5 = arith.mulf %2, %4 : vector<256x128xf32>
    %c0_5 = arith.constant 0 : index
    %c0_6 = arith.constant 0 : index
    %6 = vector.load %arg4[%c0_5, %c0_6] : memref<1x128xf32, #tpu.memory_space<vmem>>, vector<1x128xf32>
    %7 = vector.broadcast %6 : vector<1x128xf32> to vector<256x128xf32>
    %8 = arith.addf %5, %7 : vector<256x128xf32>
    %cst_7 = arith.constant 0.000000e+00 : f32
    %9 = vector.broadcast %cst_7 : f32 to vector<256x128xf32>
    %10 = arith.maximumf %8, %9 : vector<256x128xf32>
    %11 = arith.truncf %10 : vector<256x128xf32> to vector<256x128xbf16>
    %c0_8 = arith.constant 0 : index
    %c0_9 = arith.constant 0 : index
    %12 = vector.load %arg7[%c0_8, %c0_9] : memref<256x128xbf16, #tpu.memory_space<vmem>>, vector<256x128xbf16>
    tpu.vector_store %arg7[%c0_8, %c0_9], %11 {strides = array<i32>} : memref<256x128xbf16, #tpu.memory_space<vmem>>, vector<256x128xbf16>,
    return
  }
  func.func @transform_0(%arg0: i32, %arg1: i32, %arg2: i32) -> (i32, i32) {
    %c0_i32 = arith.constant 0 : i32
    %c0_i32_0 = arith.constant 0 : i32
    return %c0_i32, %arg1 : i32, i32
  }
  func.func @transform_1(%arg0: i32, %arg1: i32, %arg2: i32) -> (i32, i32) {
    %c0_i32 = arith.constant 0 : i32
    %c0_i32_0 = arith.constant 0 : i32
    return %c0_i32, %arg1 : i32, i32
  }
  func.func @transform_2(%arg0: i32, %arg1: i32, %arg2: i32) -> (i32, i32) {
    %c0_i32 = arith.constant 0 : i32
    return %arg0, %arg2 : i32, i32
  }
  func.func @transform_3(%arg0: i32, %arg1: i32, %arg2: i32) -> (i32, i32) {
    %c0_i32 = arith.constant 0 : i32
    return %arg2, %arg1 : i32, i32
  }
  func.func @transform_4(%arg0: i32, %arg1: i32, %arg2: i32) -> (i32, i32) {
    %c0_i32 = arith.constant 0 : i32
    return %arg0, %arg1 : i32, i32
  }
}

</mosaic_0001>

<llo_original>
// kernel: _fused_matmul_padded.1
$region0: #{_fused_matmul_padded.1}
  #allocation0 [shape = 'u32[]', space=smem, size = 0x4, offset = 0x4, fixed_abs, tag = 'smem constant byte address 0x4 - core index']
  #allocation1 [shape = 'u32[144,128]{1,0:T(1,128)}', space=vmem, size = 0x12000, scoped, tag = 'internal scratch']
  %s0 = inlined_call_operand.vmem [shape: f32[1,128], index: 0, kind: input, shape index: {}]
  %s1 = inlined_call_operand.vmem [shape: f32[1,128], index: 1, kind: input, shape index: {}]
  %s2 = inlined_call_operand.hbm [shape: bf16[512,256], index: 2, kind: input, shape index: {}]
  %s3 = inlined_call_operand.hbm [shape: bf16[256,128], index: 3, kind: input, shape index: {}]
  %s4 = inlined_call_operand.hbm [shape: bf16[512,128], index: 4, kind: output, shape index: {}]
  %s5 = sld [smem:[#allocation0]]
  $region57: #{_fused_matmul_padded.1} parent=0
    _
  %s7 = ssub.s32 1, %s5
  %s8 = scalar_select 0, %s7, %s5
  $region1: #{_fused_matmul_padded.1} parent=0
    #allocation2 [shape = 'u8[262144]{0}', space=vmem, size = 0x40000, scoped, tag = 'input window, operand 2']
    #allocation3 [shape = 's32[2]{0}', space=sflag, size = 0x8, scoped, tag = 'scoped memory for _fused_matmul_padded.1']
    #allocation4 [shape = 's32[2]{0}', space=sflag, size = 0x8, scoped, tag = 'scoped memory for _fused_matmul_padded.1']
    #allocation5 [shape = 'u8[65536]{0}', space=vmem, size = 0x10000, scoped, tag = 'input window, operand 3, single buffered']
    #allocation6 [shape = 's32[1]{0}', space=sflag, size = 0x4, scoped, tag = 'scoped memory for _fused_matmul_padded.1']
    #allocation7 [shape = 'u8[131072]{0}', space=vmem, size = 0x20000, scoped, tag = 'output window, operand 0']
    %9 = vsyncpa [#allocation3], 0
    %s10 = scalar_lea.sflag [#allocation3], 1
    %11 = vsyncpa %s10, 0
    %12 = vsyncpa [#allocation6], 0
    %13 = vsyncpa [#allocation4], 0
    %s14 = scalar_lea.sflag [#allocation4], 1
    %15 = vsyncpa %s14, 0
    loop: start=0, step=1, limit=4
    $region2: #{_fused_matmul_padded.1} parent=1 // loop_pre_header
      _
    $region3: #{_fused_matmul_padded.1} parent=1 // loop_header
      %s17 = sphi 0, %s21
      %p18 = scmp.ge.s32.totalorder %s17, 4
      %s24 = sphi 0, %s43
      %s25 = sphi 0, %s39
      %s26 = sphi 0, %s35
      %s27 = sphi 0, %s24
      %s28 = sphi 0, %s25
      %s29 = sphi 0, %s26
      %s30 = sphi 0, %s27
      %s31 = sphi 0, %s28
      %s32 = sphi 0, %s29
      %s46 = sphi 0, %s48
      %s49 = sphi 0, %s46
      %s50 = sphi 0, %s49
      %s66 = sphi 0, %s50
      %s72 = sphi 0, %s74
      %s75 = sphi 0, %s72
      %s76 = sphi 0, %s75
      %s92 = sphi 0, %s76
      %s100 = sphi 0, %s102
      %s103 = sphi 0, %s100
      %s104 = sphi 0, %s103
      %s120 = sphi 0, %s104
      %s128 = sphi 0, %s130
      %s131 = sphi 0, %s128
      %s132 = sphi 0, %s131
      %s148 = sphi 0, %s132
      %s156 = sphi 0, %s158
      %s159 = sphi 0, %s156
      %s160 = sphi 0, %s159
      %s176 = sphi 0, %s160
    $region4: #{_fused_matmul_padded.1} parent=1 // loop_header_branch
      %20 = sbr.rel (%p18) target = $region8
    $region5: #{_fused_matmul_padded.1} parent=1 // loop_body
      %s22 = ssub.s32 %s17, 1
      %s23 = ssub.s32 %s17, 2
      %s33 = sadd.s32 1, %s26
      %p34 = scmp.ge.s32.totalorder %s33, 1
      %s35 = scalar_select %p34, 0, %s33
      %s36 = sadd.s32 1, %s25
      %s37 = scalar_select %p34, %s36, %s25
      %p38 = scmp.ge.s32.totalorder %s37, 1
      %s39 = scalar_select %p38, 0, %s37
      %s40 = sadd.s32 1, %s24
      %s41 = scalar_select %p38, %s40, %s24
      %p42 = scmp.ge.s32.totalorder %s41, 2
      %s43 = scalar_select %p42, 0, %s41
      %s44 = ssub.s32 %s25, %s39
      %p45 = scmp.eq.s32.totalorder %s44, 0
      %s47 = sadd.s32 %s46, 1
      %s48 = scalar_select %p45, %s46, %s47
      %p51 = pneg %p45
      %p52 = scmp.eq.s32.totalorder %s17, 1
      %p53 = por %p51, %p52
      %p54 = scmp.ne.s32.totalorder %s46, %s49
      %p55 = scmp.eq.s32.totalorder %s17, 0
      %p56 = por %p54, %p55
      %p57 = scmp.ne.s32.totalorder %s46, %s49
      %p58 = scmp.eq.s32.totalorder %s22, 1
      %p59 = por %p57, %p58
      %p60 = scmp.ne.s32.totalorder %s49, %s50
      %p61 = scmp.eq.s32.totalorder %s22, 0
      %p62 = por %p60, %p61
      %p63 = scmp.ne.s32.totalorder %s49, %s50
      %p64 = scmp.eq.s32.totalorder %s23, 1
      %p65 = por %p63, %p64
      %p67 = scmp.ne.s32.totalorder %s50, %s66
      %p68 = scmp.eq.s32.totalorder %s23, 0
      %p69 = por %p67, %p68
      %s70 = ssub.s32 %s25, %s39
      %p71 = scmp.eq.s32.totalorder %s70, 0
      %s73 = sadd.s32 %s72, 1
      %s74 = scalar_select %p71, %s72, %s73
      %p77 = pneg %p71
      %p78 = scmp.eq.s32.totalorder %s17, 1
      %p79 = por %p77, %p78
      %p80 = scmp.ne.s32.totalorder %s72, %s75
      %p81 = scmp.eq.s32.totalorder %s17, 0
      %p82 = por %p80, %p81
      %p83 = scmp.ne.s32.totalorder %s72, %s75
      %p84 = scmp.eq.s32.totalorder %s22, 1
      %p85 = por %p83, %p84
      %p86 = scmp.ne.s32.totalorder %s75, %s76
      %p87 = scmp.eq.s32.totalorder %s22, 0
      %p88 = por %p86, %p87
      %p89 = scmp.ne.s32.totalorder %s75, %s76
      %p90 = scmp.eq.s32.totalorder %s23, 1
      %p91 = por %p89, %p90
      %p93 = scmp.ne.s32.totalorder %s76, %s92
      %p94 = scmp.eq.s32.totalorder %s23, 0
      %p95 = por %p93, %p94
      %s96 = ssub.s32 %s24, %s43
      %s97 = ssub.s32 %s26, %s35
      %s98 = sor.u32 %s96, %s97
      %p99 = scmp.eq.s32.totalorder %s98, 0
      %s101 = sadd.s32 %s100, 1
      %s102 = scalar_select %p99, %s100, %s101
      %p105 = pneg %p99
      %p106 = scmp.eq.s32.totalorder %s17, 1
      %p107 = por %p105, %p106
      %p108 = scmp.ne.s32.totalorder %s100, %s103
      %p109 = scmp.eq.s32.totalorder %s17, 0
      %p110 = por %p108, %p109
      %p111 = scmp.ne.s32.totalorder %s100, %s103
      %p112 = scmp.eq.s32.totalorder %s22, 1
      %p113 = por %p111, %p112
      %p114 = scmp.ne.s32.totalorder %s103, %s104
      %p115 = scmp.eq.s32.totalorder %s22, 0
      %p116 = por %p114, %p115
      %p117 = scmp.ne.s32.totalorder %s103, %s104
      %p118 = scmp.eq.s32.totalorder %s23, 1
      %p119 = por %p117, %p118
      %p121 = scmp.ne.s32.totalorder %s104, %s120
      %p122 = scmp.eq.s32.totalorder %s23, 0
      %p123 = por %p121, %p122
      %s124 = ssub.s32 %s26, %s35
      %s125 = ssub.s32 %s25, %s39
      %s126 = sor.u32 %s124, %s125
      %p127 = scmp.eq.s32.totalorder %s126, 0
      %s129 = sadd.s32 %s128, 1
      %s130 = scalar_select %p127, %s128, %s129
      %p133 = pneg %p127
      %p134 = scmp.eq.s32.totalorder %s17, 1
      %p135 = por %p133, %p134
      %p136 = scmp.ne.s32.totalorder %s128, %s131
      %p137 = scmp.eq.s32.totalorder %s17, 0
      %p138 = por %p136, %p137
      %p139 = scmp.ne.s32.totalorder %s128, %s131
      %p140 = scmp.eq.s32.totalorder %s22, 1
      %p141 = por %p139, %p140
      %p142 = scmp.ne.s32.totalorder %s131, %s132
      %p143 = scmp.eq.s32.totalorder %s22, 0
      %p144 = por %p142, %p143
      %p145 = scmp.ne.s32.totalorder %s131, %s132
      %p146 = scmp.eq.s32.totalorder %s23, 1
      %p147 = por %p145, %p146
      %p149 = scmp.ne.s32.totalorder %s132, %s148
      %p150 = scmp.eq.s32.totalorder %s23, 0
      %p151 = por %p149, %p150
      %s152 = ssub.s32 %s24, %s43
      %s153 = ssub.s32 %s25, %s39
      %s154 = sor.u32 %s152, %s153
      %p155 = scmp.eq.s32.totalorder %s154, 0
      %s157 = sadd.s32 %s156, 1
      %s158 = scalar_select %p155, %s156, %s157
      %p161 = pneg %p155
      %p162 = scmp.eq.s32.totalorder %s17, 1
      %p163 = por %p161, %p162
      %p164 = scmp.ne.s32.totalorder %s156, %s159
      %p165 = scmp.eq.s32.totalorder %s17, 0
      %p166 = por %p164, %p165
      %p167 = scmp.ne.s32.totalorder %s156, %s159
      %p168 = scmp.eq.s32.totalorder %s22, 1
      %p169 = por %p167, %p168
      %p170 = scmp.ne.s32.totalorder %s159, %s160
      %p171 = scmp.eq.s32.totalorder %s22, 0
      %p172 = por %p170, %p171
      %p173 = scmp.ne.s32.totalorder %s159, %s160
      %p174 = scmp.eq.s32.totalorder %s23, 1
      %p175 = por %p173, %p174
      %p177 = scmp.ne.s32.totalorder %s160, %s176
      %p178 = scmp.eq.s32.totalorder %s23, 0
      %p179 = por %p177, %p178
      %p180 = scmp.le.s32.totalorder 1, %s17
      %p181 = scmp.lt.s32.totalorder %s17, 3
      %p182 = pnand %p180, %p181
      %p183 = pneg %p182
      // Predicated region
      $region9: #{_fused_matmul_padded.1} parent=5 // pred_check
        _
      $region10: #{_fused_matmul_padded.1} parent=5 // pred_check_branch
        %185 = sbr.rel (%p182) target = $region12
      $region11: #{_fused_matmul_padded.1} parent=5 // pred_region
        %s186 = ssub.s32 %s17, 1
        // Predicated region
        $region13: #{_fused_matmul_padded.1} parent=11 // pred_check
          %p187 = pneg %p62
        $region14: #{_fused_matmul_padded.1} parent=11 // pred_check_branch
          %189 = sbr.rel (%p187) target = $region16
        $region15: #{_fused_matmul_padded.1} parent=11 // pred_region
          %p190 = scmp.lt.s32.totalorder %s28, 0
          %s191 = scalar_select %p190, %s28, 0
          %s192 = scalar_lea.vmem %s0, %s191
        $region16: #{_fused_matmul_padded.1} parent=11 // pred_fallthru
          _
        // Predicated region
        $region17: #{_fused_matmul_padded.1} parent=11 // pred_check
          %p193 = pneg %p88
        $region18: #{_fused_matmul_padded.1} parent=11 // pred_check_branch
          %195 = sbr.rel (%p193) target = $region20
        $region19: #{_fused_matmul_padded.1} parent=11 // pred_region
          %p196 = scmp.lt.s32.totalorder %s28, 0
          %s197 = scalar_select %p196, %s28, 0
          %s198 = scalar_lea.vmem %s1, %s197
        $region20: #{_fused_matmul_padded.1} parent=11 // pred_fallthru
          _
        // Predicated region
        $region21: #{_fused_matmul_padded.1} parent=11 // pred_check
          %p199 = pneg %p144
        $region22: #{_fused_matmul_padded.1} parent=11 // pred_check_branch
          %201 = sbr.rel (%p199) target = $region24
        $region23: #{_fused_matmul_padded.1} parent=11 // pred_region
          %s202 = smul.u32 32, %s29
          %s204 = ssub.s32 2048, 2048
          %205 = vsyncadd [#allocation6], %s204
          %s206 = sadd.s32 %s28, %s202
          %s207 = smul.addr %s206, 64
          %s208 = scalar_lea.hbm %s3, %s207
          %s209 = sshll.u32 [#allocation5], 4
          %s210 = int_to_ptr.vmem [resolvable:$true] %s209
          %215 = dma.hbm_to_vmem [thread:$0]  %s208, 2048, %s210, [#allocation6], 64, 64, 4
        $region24: #{_fused_matmul_padded.1} parent=11 // pred_fallthru
          _
      $region12: #{_fused_matmul_padded.1} parent=5 // pred_fallthru
        _
      %p216 = scmp.lt.s32.totalorder %s17, 2
      // Predicated region
      $region25: #{_fused_matmul_padded.1} parent=5 // pred_check
        %p217 = pneg %p216
      $region26: #{_fused_matmul_padded.1} parent=5 // pred_check_branch
        %219 = sbr.rel (%p217) target = $region28
      $region27: #{_fused_matmul_padded.1} parent=5 // pred_region
        // Predicated region
        $region29: #{_fused_matmul_padded.1} parent=27 // pred_check
          %p220 = pneg %p110
        $region30: #{_fused_matmul_padded.1} parent=27 // pred_check_branch
          %222 = sbr.rel (%p220) target = $region32
        $region31: #{_fused_matmul_padded.1} parent=27 // pred_region
          %s223 = sand.u32 %s100, 1
          %s224 = scalar_lea.sflag [#allocation3], %s223
          %s225 = sand.u32 %s100, 1
          %s226 = smul.addr %s225, 256
          %s227 = scalar_lea.vmem [#allocation2], %s226
          %s228 = smul.u32 32, %s24
          %s229 = smul.u32 2, %s26
          %s231 = ssub.s32 4096, 4096
          %232 = vsyncadd %s224, %s231
          %s233 = smul.addr %s228, 2
          %s234 = sadd.s32 %s229, %s233
          %s235 = smul.addr %s234, 64
          %s236 = scalar_lea.hbm %s2, %s235
          %s237 = sshll.u32 %s227, 4
          %s238 = int_to_ptr.vmem [resolvable:$true] %s237
          %243 = dma.hbm_to_vmem [thread:$0]  %s236, 4096, %s238, %s224, 128, 128, 8
        $region32: #{_fused_matmul_padded.1} parent=27 // pred_fallthru
          _
      $region28: #{_fused_matmul_padded.1} parent=5 // pred_fallthru
        _
      %p244 = scmp.le.s32.totalorder 1, %s17
      %p245 = scmp.lt.s32.totalorder %s17, 3
      %p246 = pnand %p244, %p245
      %p247 = pneg %p246
      // Predicated region
      $region33: #{_fused_matmul_padded.1} parent=5 // pred_check
        _
      $region34: #{_fused_matmul_padded.1} parent=5 // pred_check_branch
        %249 = sbr.rel (%p246) target = $region36
      $region35: #{_fused_matmul_padded.1} parent=5 // pred_region
        %s250 = ssub.s32 %s17, 1
        %s251 = sand.u32 %s103, 1
        %s252 = scalar_lea.sflag [#allocation3], %s251
        %s253 = sand.u32 %s103, 1
        %s254 = smul.addr %s253, 256
        %s255 = scalar_lea.vmem [#allocation2], %s254
        // Predicated region
        $region37: #{_fused_matmul_padded.1} parent=35 // pred_check
          %p256 = pneg %p116
        $region38: #{_fused_matmul_padded.1} parent=35 // pred_check_branch
          %258 = sbr.rel (%p256) target = $region40
        $region39: #{_fused_matmul_padded.1} parent=35 // pred_region
          %259 = dma.done %s252, 4096
        $region40: #{_fused_matmul_padded.1} parent=35 // pred_fallthru
          _
        // Predicated region
        $region41: #{_fused_matmul_padded.1} parent=35 // pred_check
          %p260 = pneg %p144
        $region42: #{_fused_matmul_padded.1} parent=35 // pred_check_branch
          %262 = sbr.rel (%p260) target = $region44
        $region43: #{_fused_matmul_padded.1} parent=35 // pred_region
          %263 = dma.done [#allocation6], 2048
        $region44: #{_fused_matmul_padded.1} parent=35 // pred_fallthru
          _
        %p264 = scmp.lt.s32.totalorder %s28, 0
        %s265 = scalar_select %p264, %s28, 0
        %s266 = scalar_lea.vmem %s0, %s265
        %p267 = pneg %p62
        %p268 = pneg %p59
        %p269 = scmp.lt.s32.totalorder %s28, 0
        %s270 = scalar_select %p269, %s28, 0
        %s271 = scalar_lea.vmem %s1, %s270
        %p272 = pneg %p88
        %p273 = pneg %p85
        %s274 = sand.u32 %s103, 1
        %s275 = scalar_lea.sflag [#allocation3], %s274
        %s276 = sand.u32 %s103, 1
        %s277 = smul.addr %s276, 256
        %s278 = scalar_lea.vmem [#allocation2], %s277
        %p279 = pneg %p116
        %p280 = pneg %p113
        %p281 = pneg %p144
        %p282 = pneg %p141
        %p283 = pneg %p172
        %p284 = pneg %p169
        %s285 = sand.u32 %s159, 1
        %s286 = scalar_lea.sflag [#allocation4], %s285
        %s287 = sand.u32 %s159, 1
        %s288 = smul.addr %s287, 128
        %s289 = scalar_lea.vmem [#allocation7], %s288
        %p290 = scmp.lt.s32.totalorder %s28, 0
        %s291 = scalar_select %p290, %s28, 0
        %s292 = scalar_lea.vmem %s0, %s291
        %p293 = scmp.lt.s32.totalorder %s28, 0
        %s294 = scalar_select %p293, %s28, 0
        %s295 = scalar_lea.vmem %s1, %s294
        %s296 = smul.u32 32, %s27
        %s297 = smul.u32 2, %s29
        %s298 = smul.u32 32, %s29
        %s299 = smul.u32 32, %s27
        %v301 = vld [vmem:[%s255] sm:$0xff]
        %v302 = vld [vmem:[%s255 + $0x8] sm:$0xff]
        %v303 = vld [vmem:[%s255 + $0x10] sm:$0xff]
        %v304 = vld [vmem:[%s255 + $0x18] sm:$0xff]
        %v305 = vld [vmem:[%s255 + $0x20] sm:$0xff]
        %v306 = vld [vmem:[%s255 + $0x28] sm:$0xff]
        %v307 = vld [vmem:[%s255 + $0x30] sm:$0xff]
        %v308 = vld [vmem:[%s255 + $0x38] sm:$0xff]
        %v309 = vld [vmem:[%s255 + $0x40] sm:$0xff]
        %v310 = vld [vmem:[%s255 + $0x48] sm:$0xff]
        %v311 = vld [vmem:[%s255 + $0x50] sm:$0xff]
        %v312 = vld [vmem:[%s255 + $0x58] sm:$0xff]
        %v313 = vld [vmem:[%s255 + $0x60] sm:$0xff]
        %v314 = vld [vmem:[%s255 + $0x68] sm:$0xff]
        %v315 = vld [vmem:[%s255 + $0x70] sm:$0xff]
        %v316 = vld [vmem:[%s255 + $0x78] sm:$0xff]
        %v317 = vld [vmem:[%s255 + $0x80] sm:$0xff]
        %v318 = vld [vmem:[%s255 + $0x88] sm:$0xff]
        %v319 = vld [vmem:[%s255 + $0x90] sm:$0xff]
        %v320 = vld [vmem:[%s255 + $0x98] sm:$0xff]
        %v321 = vld [vmem:[%s255 + $0xa0] sm:$0xff]
        %v322 = vld [vmem:[%s255 + $0xa8] sm:$0xff]
        %v323 = vld [vmem:[%s255 + $0xb0] sm:$0xff]
        %v324 = vld [vmem:[%s255 + $0xb8] sm:$0xff]
        %v325 = vld [vmem:[%s255 + $0xc0] sm:$0xff]
        %v326 = vld [vmem:[%s255 + $0xc8] sm:$0xff]
        %v327 = vld [vmem:[%s255 + $0xd0] sm:$0xff]
        %v328 = vld [vmem:[%s255 + $0xd8] sm:$0xff]
        %v329 = vld [vmem:[%s255 + $0xe0] sm:$0xff]
        %v330 = vld [vmem:[%s255 + $0xe8] sm:$0xff]
        %v331 = vld [vmem:[%s255 + $0xf0] sm:$0xff]
        %v332 = vld [vmem:[%s255 + $0xf8] sm:$0xff]
        %v333 = vld [vmem:[#allocation5] sm:$0xf]
        %v334 = vld [vmem:[#allocation5 + $0x4] sm:$0xf]
        %v335 = vld [vmem:[#allocation5 + $0x8] sm:$0xf]
        %v336 = vld [vmem:[#allocation5 + $0xc] sm:$0xf]
        %v337 = vld [vmem:[#allocation5 + $0x10] sm:$0xf]
        %v338 = vld [vmem:[#allocation5 + $0x14] sm:$0xf]
        %v339 = vld [vmem:[#allocation5 + $0x18] sm:$0xf]
        %v340 = vld [vmem:[#allocation5 + $0x1c] sm:$0xf]
        %v341 = vld [vmem:[#allocation5 + $0x20] sm:$0xf]
        %v342 = vld [vmem:[#allocation5 + $0x24] sm:$0xf]
        %v343 = vld [vmem:[#allocation5 + $0x28] sm:$0xf]
        %v344 = vld [vmem:[#allocation5 + $0x2c] sm:$0xf]
        %v345 = vld [vmem:[#allocation5 + $0x30] sm:$0xf]
        %v346 = vld [vmem:[#allocation5 + $0x34] sm:$0xf]
        %v347 = vld [vmem:[#allocation5 + $0x38] sm:$0xf]
        %v348 = vld [vmem:[#allocation5 + $0x3c] sm:$0xf]
        %v349 = vld [vmem:[#allocation5 + $0x40] sm:$0xf]
        %v350 = vld [vmem:[#allocation5 + $0x44] sm:$0xf]
        %v351 = vld [vmem:[#allocation5 + $0x48] sm:$0xf]
        %v352 = vld [vmem:[#allocation5 + $0x4c] sm:$0xf]
        %v353 = vld [vmem:[#allocation5 + $0x50] sm:$0xf]
        %v354 = vld [vmem:[#allocation5 + $0x54] sm:$0xf]
        %v355 = vld [vmem:[#allocation5 + $0x58] sm:$0xf]
        %v356 = vld [vmem:[#allocation5 + $0x5c] sm:$0xf]
        %v357 = vld [vmem:[#allocation5 + $0x60] sm:$0xf]
        %v358 = vld [vmem:[#allocation5 + $0x64] sm:$0xf]
        %v359 = vld [vmem:[#allocation5 + $0x68] sm:$0xf]
        %v360 = vld [vmem:[#allocation5 + $0x6c] sm:$0xf]
        %v361 = vld [vmem:[#allocation5 + $0x70] sm:$0xf]
        %v362 = vld [vmem:[#allocation5 + $0x74] sm:$0xf]
        %v363 = vld [vmem:[#allocation5 + $0x78] sm:$0xf]
        %v364 = vld [vmem:[#allocation5 + $0x7c] sm:$0xf]
        %v397 = vunpack.c.l.b16 %v301
        %v398 = vunpack.c.h.b16 %v301
        %v399 = vunpack.c.l.b16 %v302
        %v400 = vunpack.c.h.b16 %v302
        %v401 = vunpack.c.l.b16 %v303
        %v402 = vunpack.c.h.b16 %v303
        %v403 = vunpack.c.l.b16 %v304
        %v404 = vunpack.c.h.b16 %v304
        %v405 = vunpack.c.l.b16 %v305
        %v406 = vunpack.c.h.b16 %v305
        %v407 = vunpack.c.l.b16 %v306
        %v408 = vunpack.c.h.b16 %v306
        %v409 = vunpack.c.l.b16 %v307
        %v410 = vunpack.c.h.b16 %v307
        %v411 = vunpack.c.l.b16 %v308
        %v412 = vunpack.c.h.b16 %v308
        %v413 = vunpack.c.l.b16 %v309
        %v414 = vunpack.c.h.b16 %v309
        %v415 = vunpack.c.l.b16 %v310
        %v416 = vunpack.c.h.b16 %v310
        %v417 = vunpack.c.l.b16 %v311
        %v418 = vunpack.c.h.b16 %v311
        %v419 = vunpack.c.l.b16 %v312
        %v420 = vunpack.c.h.b16 %v312
        %v421 = vunpack.c.l.b16 %v313
        %v422 = vunpack.c.h.b16 %v313
        %v423 = vunpack.c.l.b16 %v314
        %v424 = vunpack.c.h.b16 %v314
        %v425 = vunpack.c.l.b16 %v315
        %v426 = vunpack.c.h.b16 %v315
        %v427 = vunpack.c.l.b16 %v316
        %v428 = vunpack.c.h.b16 %v316
        %v429 = vunpack.c.l.b16 %v317
        %v430 = vunpack.c.h.b16 %v317
        %v431 = vunpack.c.l.b16 %v318
        %v432 = vunpack.c.h.b16 %v318
        %v433 = vunpack.c.l.b16 %v319
        %v434 = vunpack.c.h.b16 %v319
        %v435 = vunpack.c.l.b16 %v320
        %v436 = vunpack.c.h.b16 %v320
        %v437 = vunpack.c.l.b16 %v321
        %v438 = vunpack.c.h.b16 %v321
        %v439 = vunpack.c.l.b16 %v322
        %v440 = vunpack.c.h.b16 %v322
        %v441 = vunpack.c.l.b16 %v323
        %v442 = vunpack.c.h.b16 %v323
        %v443 = vunpack.c.l.b16 %v324
        %v444 = vunpack.c.h.b16 %v324
        %v445 = vunpack.c.l.b16 %v325
        %v446 = vunpack.c.h.b16 %v325
        %v447 = vunpack.c.l.b16 %v326
        %v448 = vunpack.c.h.b16 %v326
        %v449 = vunpack.c.l.b16 %v327
        %v450 = vunpack.c.h.b16 %v327
        %v451 = vunpack.c.l.b16 %v328
        %v452 = vunpack.c.h.b16 %v328
        %v453 = vunpack.c.l.b16 %v329
        %v454 = vunpack.c.h.b16 %v329
        %v455 = vunpack.c.l.b16 %v330
        %v456 = vunpack.c.h.b16 %v330
        %v457 = vunpack.c.l.b16 %v331
        %v458 = vunpack.c.h.b16 %v331
        %v459 = vunpack.c.l.b16 %v332
        %v460 = vunpack.c.h.b16 %v332
        %v461 = vpack.c.b16 %v399, %v397
        %v462 = vpack.c.b16 %v400, %v398
        %v463 = vpack.c.b16 %v403, %v401
        %v464 = vpack.c.b16 %v404, %v402
        %v465 = vpack.c.b16 %v407, %v405
        %v466 = vpack.c.b16 %v408, %v406
        %v467 = vpack.c.b16 %v411, %v409
        %v468 = vpack.c.b16 %v412, %v410
        %v469 = vpack.c.b16 %v415, %v413
        %v470 = vpack.c.b16 %v416, %v414
        %v471 = vpack.c.b16 %v419, %v417
        %v472 = vpack.c.b16 %v420, %v418
        %v473 = vpack.c.b16 %v423, %v421
        %v474 = vpack.c.b16 %v424, %v422
        %v475 = vpack.c.b16 %v427, %v425
        %v476 = vpack.c.b16 %v428, %v426
        %v477 = vpack.c.b16 %v431, %v429
        %v478 = vpack.c.b16 %v432, %v430
        %v479 = vpack.c.b16 %v435, %v433
        %v480 = vpack.c.b16 %v436, %v434
        %v481 = vpack.c.b16 %v439, %v437
        %v482 = vpack.c.b16 %v440, %v438
        %v483 = vpack.c.b16 %v443, %v441
        %v484 = vpack.c.b16 %v444, %v442
        %v485 = vpack.c.b16 %v447, %v445
        %v486 = vpack.c.b16 %v448, %v446
        %v487 = vpack.c.b16 %v451, %v449
        %v488 = vpack.c.b16 %v452, %v450
        %v489 = vpack.c.b16 %v455, %v453
        %v490 = vpack.c.b16 %v456, %v454
        %v491 = vpack.c.b16 %v459, %v457
        %v492 = vpack.c.b16 %v460, %v458
        %v557 = vunpack.c.l.b16 %v333
        %v558 = vunpack.c.l.b16 %v334
        %v559 = vunpack.c.l.b16 %v335
        %v560 = vunpack.c.l.b16 %v336
        %v561 = vunpack.c.l.b16 %v337
        %v562 = vunpack.c.l.b16 %v338
        %v563 = vunpack.c.l.b16 %v339
        %v564 = vunpack.c.l.b16 %v340
        %v565 = vunpack.c.l.b16 %v341
        %v566 = vunpack.c.l.b16 %v342
        %v567 = vunpack.c.l.b16 %v343
        %v568 = vunpack.c.l.b16 %v344
        %v569 = vunpack.c.l.b16 %v345
        %v570 = vunpack.c.l.b16 %v346
        %v571 = vunpack.c.l.b16 %v347
        %v572 = vunpack.c.l.b16 %v348
        %v573 = vunpack.c.l.b16 %v349
        %v574 = vunpack.c.l.b16 %v350
        %v575 = vunpack.c.l.b16 %v351
        %v576 = vunpack.c.l.b16 %v352
        %v577 = vunpack.c.l.b16 %v353
        %v578 = vunpack.c.l.b16 %v354
        %v579 = vunpack.c.l.b16 %v355
        %v580 = vunpack.c.l.b16 %v356
        %v581 = vunpack.c.l.b16 %v357
        %v582 = vunpack.c.l.b16 %v358
        %v583 = vunpack.c.l.b16 %v359
        %v584 = vunpack.c.l.b16 %v360
        %v585 = vunpack.c.l.b16 %v361
        %v586 = vunpack.c.l.b16 %v362
        %v587 = vunpack.c.l.b16 %v363
        %v588 = vunpack.c.l.b16 %v364
        %v589 = vpack.c.b16 %v558, %v557
        %v590 = vpack.c.b16 %v560, %v559
        %v591 = vpack.c.b16 %v562, %v561
        %v592 = vpack.c.b16 %v564, %v563
        %v593 = vpack.c.b16 %v566, %v565
        %v594 = vpack.c.b16 %v568, %v567
        %v595 = vpack.c.b16 %v570, %v569
        %v596 = vpack.c.b16 %v572, %v571
        %v597 = vpack.c.b16 %v574, %v573
        %v598 = vpack.c.b16 %v576, %v575
        %v599 = vpack.c.b16 %v578, %v577
        %v600 = vpack.c.b16 %v580, %v579
        %v601 = vpack.c.b16 %v582, %v581
        %v602 = vpack.c.b16 %v584, %v583
        %v603 = vpack.c.b16 %v586, %v585
        %v604 = vpack.c.b16 %v588, %v587
        %621 = vmatprep.subr.bf16.mxu0 0
        %622 = vmatpush1.bf16.msra.mxu0 %v589
        %623 = vmatprep.subr.bf16.mxu0 0
        %624 = vmatpush1.bf16.msra.mxu0 %v590
        %625 = vmatprep.subr.bf16.mxu0 0
        %626 = vmatpush1.bf16.msra.mxu0 %v591
        %627 = vmatprep.subr.bf16.mxu0 0
        %628 = vmatpush1.bf16.msra.mxu0 %v592
        %629 = vmatprep.subr.bf16.mxu0 0
        %630 = vmatpush1.bf16.msra.mxu0 %v593
        %631 = vmatprep.subr.bf16.mxu0 0
        %632 = vmatpush1.bf16.msra.mxu0 %v594
        %633 = vmatprep.subr.bf16.mxu0 0
        %634 = vmatpush1.bf16.msra.mxu0 %v595
        %635 = vmatprep.subr.bf16.mxu0 0
        %636 = vmatpush1.bf16.msra.mxu0 %v596
        %637 = vmatprep.subr.bf16.mxu0 0
        %638 = vmatpush1.bf16.msra.mxu0 %v597
        %639 = vmatprep.subr.bf16.mxu0 0
        %640 = vmatpush1.bf16.msra.mxu0 %v598
        %641 = vmatprep.subr.bf16.mxu0 0
        %642 = vmatpush1.bf16.msra.mxu0 %v599
        %643 = vmatprep.subr.bf16.mxu0 0
        %644 = vmatpush1.bf16.msra.mxu0 %v600
        %645 = vmatprep.subr.bf16.mxu0 0
        %646 = vmatpush1.bf16.msra.mxu0 %v601
        %647 = vmatprep.subr.bf16.mxu0 0
        %648 = vmatpush1.bf16.msra.mxu0 %v602
        %649 = vmatprep.subr.bf16.mxu0 0
        %650 = vmatpush1.bf16.msra.mxu0 %v603
        %651 = vmatprep.subr.bf16.mxu0 0
        %652 = vmatpush1.bf16.msra.mxu0 %v604
        %653 = vmatprep.mubr.bf16.mxu0 %v462
        %654 = vmatmul.mubr.bf16.gmra.mrb[0].mxu0 %v461
        %v655 = vpop.f32.mrb[0].mxu0
        %v656 = vadd.f32 0.0, %v655
        %v657 = vpop.f32.mrb[0].mxu0
        %v658 = vpop.f32.mrb[0].mxu0
        %v659 = vadd.f32 0.0, %v658
        %v660 = vpop.f32.mrb[0].mxu0
        %661 = vmatprep.mubr.bf16.mxu0 %v464
        %662 = vmatmul.mubr.bf16.gmra.mrb[0].mxu0 %v463
        %v663 = vpop.f32.mrb[0].mxu0
        %v664 = vadd.f32 0.0, %v663
        %v665 = vpop.f32.mrb[0].mxu0
        %v666 = vpop.f32.mrb[0].mxu0
        %v667 = vadd.f32 0.0, %v666
        %v668 = vpop.f32.mrb[0].mxu0
        %669 = vmatprep.mubr.bf16.mxu0 %v466
        %670 = vmatmul.mubr.bf16.gmra.mrb[0].mxu0 %v465
        %v671 = vpop.f32.mrb[0].mxu0
        %v672 = vadd.f32 0.0, %v671
        %v673 = vpop.f32.mrb[0].mxu0
        %v674 = vpop.f32.mrb[0].mxu0
        %v675 = vadd.f32 0.0, %v674
        %v676 = vpop.f32.mrb[0].mxu0
        %677 = vmatprep.mubr.bf16.mxu0 %v468
        %678 = vmatmul.mubr.bf16.gmra.mrb[0].mxu0 %v467
        %v679 = vpop.f32.mrb[0].mxu0
        %v680 = vadd.f32 0.0, %v679
        %v681 = vpop.f32.mrb[0].mxu0
        %v682 = vpop.f32.mrb[0].mxu0
        %v683 = vadd.f32 0.0, %v682
        %v684 = vpop.f32.mrb[0].mxu0
        %685 = vmatprep.mubr.bf16.mxu0 %v470
        %686 = vmatmul.mubr.bf16.gmra.mrb[0].mxu0 %v469
        %v687 = vpop.f32.mrb[0].mxu0
        %v688 = vadd.f32 0.0, %v687
        %v689 = vpop.f32.mrb[0].mxu0
        %v690 = vpop.f32.mrb[0].mxu0
        %v691 = vadd.f32 0.0, %v690
        %v692 = vpop.f32.mrb[0].mxu0
        %693 = vmatprep.mubr.bf16.mxu0 %v472
        %694 = vmatmul.mubr.bf16.gmra.mrb[0].mxu0 %v471
        %v695 = vpop.f32.mrb[0].mxu0
        %v696 = vadd.f32 0.0, %v695
        %v697 = vpop.f32.mrb[0].mxu0
        %v698 = vpop.f32.mrb[0].mxu0
        %v699 = vadd.f32 0.0, %v698
        %v700 = vpop.f32.mrb[0].mxu0
        %701 = vmatprep.mubr.bf16.mxu0 %v474
        %702 = vmatmul.mubr.bf16.gmra.mrb[0].mxu0 %v473
        %v703 = vpop.f32.mrb[0].mxu0
        %v704 = vadd.f32 0.0, %v703
        %v705 = vpop.f32.mrb[0].mxu0
        %v706 = vpop.f32.mrb[0].mxu0
        %v707 = vadd.f32 0.0, %v706
        %v708 = vpop.f32.mrb[0].mxu0
        %709 = vmatprep.mubr.bf16.mxu0 %v476
        %710 = vmatmul.mubr.bf16.gmra.mrb[0].mxu0 %v475
        %v711 = vpop.f32.mrb[0].mxu0
        %v712 = vadd.f32 0.0, %v711
        %v713 = vpop.f32.mrb[0].mxu0
        %v714 = vpop.f32.mrb[0].mxu0
        %v715 = vadd.f32 0.0, %v714
        %v716 = vpop.f32.mrb[0].mxu0
        %717 = vmatprep.mubr.bf16.mxu0 %v478
        %718 = vmatmul.mubr.bf16.gmra.mrb[0].mxu0 %v477
        %v719 = vpop.f32.mrb[0].mxu0
        %v720 = vadd.f32 0.0, %v719
        %v721 = vpop.f32.mrb[0].mxu0
        %v722 = vpop.f32.mrb[0].mxu0
        %v723 = vadd.f32 0.0, %v722
        %v724 = vpop.f32.mrb[0].mxu0
        %725 = vmatprep.mubr.bf16.mxu0 %v480
        %726 = vmatmul.mubr.bf16.gmra.mrb[0].mxu0 %v479
        %v727 = vpop.f32.mrb[0].mxu0
        %v728 = vadd.f32 0.0, %v727
        %v729 = vpop.f32.mrb[0].mxu0
        %v730 = vpop.f32.mrb[0].mxu0
        %v731 = vadd.f32 0.0, %v730
        %v732 = vpop.f32.mrb[0].mxu0
        %733 = vmatprep.mubr.bf16.mxu0 %v482
        %734 = vmatmul.mubr.bf16.gmra.mrb[0].mxu0 %v481
        %v735 = vpop.f32.mrb[0].mxu0
        %v736 = vadd.f32 0.0, %v735
        %v737 = vpop.f32.mrb[0].mxu0
        %v738 = vpop.f32.mrb[0].mxu0
        %v739 = vadd.f32 0.0, %v738
        %v740 = vpop.f32.mrb[0].mxu0
        %741 = vmatprep.mubr.bf16.mxu0 %v484
        %742 = vmatmul.mubr.bf16.gmra.mrb[0].mxu0 %v483
        %v743 = vpop.f32.mrb[0].mxu0
        %v744 = vadd.f32 0.0, %v743
        %v745 = vpop.f32.mrb[0].mxu0
        %v746 = vpop.f32.mrb[0].mxu0
        %v747 = vadd.f32 0.0, %v746
        %v748 = vpop.f32.mrb[0].mxu0
        %749 = vmatprep.mubr.bf16.mxu0 %v486
        %750 = vmatmul.mubr.bf16.gmra.mrb[0].mxu0 %v485
        %v751 = vpop.f32.mrb[0].mxu0
        %v752 = vadd.f32 0.0, %v751
        %v753 = vpop.f32.mrb[0].mxu0
        %v754 = vpop.f32.mrb[0].mxu0
        %v755 = vadd.f32 0.0, %v754
        %v756 = vpop.f32.mrb[0].mxu0
        %757 = vmatprep.mubr.bf16.mxu0 %v488
        %758 = vmatmul.mubr.bf16.gmra.mrb[0].mxu0 %v487
        %v759 = vpop.f32.mrb[0].mxu0
        %v760 = vadd.f32 0.0, %v759
        %v761 = vpop.f32.mrb[0].mxu0
        %v762 = vpop.f32.mrb[0].mxu0
        %v763 = vadd.f32 0.0, %v762
        %v764 = vpop.f32.mrb[0].mxu0
        %765 = vmatprep.mubr.bf16.mxu0 %v490
        %766 = vmatmul.mubr.bf16.gmra.mrb[0].mxu0 %v489
        %v767 = vpop.f32.mrb[0].mxu0
        %v768 = vadd.f32 0.0, %v767
        %v769 = vpop.f32.mrb[0].mxu0
        %v770 = vpop.f32.mrb[0].mxu0
        %v771 = vadd.f32 0.0, %v770
        %v772 = vpop.f32.mrb[0].mxu0
        %773 = vmatprep.mubr.bf16.mxu0 %v492
        %774 = vmatmul.mubr.bf16.gmra.mrb[0].mxu0 %v491
        %v775 = vpop.f32.mrb[0].mxu0
        %v776 = vadd.f32 0.0, %v775
        %v777 = vpop.f32.mrb[0].mxu0
        %v778 = vpop.f32.mrb[0].mxu0
        %v779 = vadd.f32 0.0, %v778
        %v780 = vpop.f32.mrb[0].mxu0
        %781 = vdwg.mxu0
        %v782 = vld [vmem:[%s292] sm:$0x1]
        %v784 = vlaneseq
        %v785 = vshrl.u32 %v784, 7
        %v786 = vsub.s32 0, %v785
        %v787 = vrot.slane %v782, %v786
        %v789 = vmul.f32 %v656, %v787
        %v790 = vmul.f32 %v659, %v787
        %v791 = vmul.f32 %v664, %v787
        %v792 = vmul.f32 %v667, %v787
        %v793 = vmul.f32 %v672, %v787
        %v794 = vmul.f32 %v675, %v787
        %v795 = vmul.f32 %v680, %v787
        %v796 = vmul.f32 %v683, %v787
        %v797 = vmul.f32 %v688, %v787
        %v798 = vmul.f32 %v691, %v787
        %v799 = vmul.f32 %v696, %v787
        %v800 = vmul.f32 %v699, %v787
        %v801 = vmul.f32 %v704, %v787
        %v802 = vmul.f32 %v707, %v787
        %v803 = vmul.f32 %v712, %v787
        %v804 = vmul.f32 %v715, %v787
        %v805 = vmul.f32 %v720, %v787
        %v806 = vmul.f32 %v723, %v787
        %v807 = vmul.f32 %v728, %v787
        %v808 = vmul.f32 %v731, %v787
        %v809 = vmul.f32 %v736, %v787
        %v810 = vmul.f32 %v739, %v787
        %v811 = vmul.f32 %v744, %v787
        %v812 = vmul.f32 %v747, %v787
        %v813 = vmul.f32 %v752, %v787
        %v814 = vmul.f32 %v755, %v787
        %v815 = vmul.f32 %v760, %v787
        %v816 = vmul.f32 %v763, %v787
        %v817 = vmul.f32 %v768, %v787
        %v818 = vmul.f32 %v771, %v787
        %v819 = vmul.f32 %v776, %v787
        %v820 = vmul.f32 %v779, %v787
        %v821 = vld [vmem:[%s295] sm:$0x1]
        %v823 = vlaneseq
        %v824 = vshrl.u32 %v823, 7
        %v825 = vsub.s32 0, %v824
        %v826 = vrot.slane %v821, %v825
        %v828 = vadd.f32 %v789, %v826
        %v829 = vadd.f32 %v790, %v826
        %v830 = vadd.f32 %v791, %v826
        %v831 = vadd.f32 %v792, %v826
        %v832 = vadd.f32 %v793, %v826
        %v833 = vadd.f32 %v794, %v826
        %v834 = vadd.f32 %v795, %v826
        %v835 = vadd.f32 %v796, %v826
        %v836 = vadd.f32 %v797, %v826
        %v837 = vadd.f32 %v798, %v826
        %v838 = vadd.f32 %v799, %v826
        %v839 = vadd.f32 %v800, %v826
        %v840 = vadd.f32 %v801, %v826
        %v841 = vadd.f32 %v802, %v826
        %v842 = vadd.f32 %v803, %v826
        %v843 = vadd.f32 %v804, %v826
        %v844 = vadd.f32 %v805, %v826
        %v845 = vadd.f32 %v806, %v826
        %v846 = vadd.f32 %v807, %v826
        %v847 = vadd.f32 %v808, %v826
        %v848 = vadd.f32 %v809, %v826
        %v849 = vadd.f32 %v810, %v826
        %v850 = vadd.f32 %v811, %v826
        %v851 = vadd.f32 %v812, %v826
        %v852 = vadd.f32 %v813, %v826
        %v853 = vadd.f32 %v814, %v826
        %v854 = vadd.f32 %v815, %v826
        %v855 = vadd.f32 %v816, %v826
        %v856 = vadd.f32 %v817, %v826
        %v857 = vadd.f32 %v818, %v826
        %v858 = vadd.f32 %v819, %v826
        %v859 = vadd.f32 %v820, %v826
        %v860 = vmax.f32 %v828, 0.0
        %v861 = vmax.f32 %v829, 0.0
        %v862 = vmax.f32 %v830, 0.0
        %v863 = vmax.f32 %v831, 0.0
        %v864 = vmax.f32 %v832, 0.0
        %v865 = vmax.f32 %v833, 0.0
        %v866 = vmax.f32 %v834, 0.0
        %v867 = vmax.f32 %v835, 0.0
        %v868 = vmax.f32 %v836, 0.0
        %v869 = vmax.f32 %v837, 0.0
        %v870 = vmax.f32 %v838, 0.0
        %v871 = vmax.f32 %v839, 0.0
        %v872 = vmax.f32 %v840, 0.0
        %v873 = vmax.f32 %v841, 0.0
        %v874 = vmax.f32 %v842, 0.0
        %v875 = vmax.f32 %v843, 0.0
        %v876 = vmax.f32 %v844, 0.0
        %v877 = vmax.f32 %v845, 0.0
        %v878 = vmax.f32 %v846, 0.0
        %v879 = vmax.f32 %v847, 0.0
        %v880 = vmax.f32 %v848, 0.0
        %v881 = vmax.f32 %v849, 0.0
        %v882 = vmax.f32 %v850, 0.0
        %v883 = vmax.f32 %v851, 0.0
        %v884 = vmax.f32 %v852, 0.0
        %v885 = vmax.f32 %v853, 0.0
        %v886 = vmax.f32 %v854, 0.0
        %v887 = vmax.f32 %v855, 0.0
        %v888 = vmax.f32 %v856, 0.0
        %v889 = vmax.f32 %v857, 0.0
        %v890 = vmax.f32 %v858, 0.0
        %v891 = vmax.f32 %v859, 0.0
        %v892 = vpack.c.bf16 %v861, %v860
        %v893 = vpack.c.bf16 %v863, %v862
        %v894 = vpack.c.bf16 %v865, %v864
        %v895 = vpack.c.bf16 %v867, %v866
        %v896 = vpack.c.bf16 %v869, %v868
        %v897 = vpack.c.bf16 %v871, %v870
        %v898 = vpack.c.bf16 %v873, %v872
        %v899 = vpack.c.bf16 %v875, %v874
        %v900 = vpack.c.bf16 %v877, %v876
        %v901 = vpack.c.bf16 %v879, %v878
        %v902 = vpack.c.bf16 %v881, %v880
        %v903 = vpack.c.bf16 %v883, %v882
        %v904 = vpack.c.bf16 %v885, %v884
        %v905 = vpack.c.bf16 %v887, %v886
        %v906 = vpack.c.bf16 %v889, %v888
        %v907 = vpack.c.bf16 %v891, %v890
        %v924 = vunpack.c.l.b16 %v892
        %v925 = vunpack.c.h.b16 %v892
        %v926 = vunpack.c.l.b16 %v893
        %v927 = vunpack.c.h.b16 %v893
        %v928 = vunpack.c.l.b16 %v894
        %v929 = vunpack.c.h.b16 %v894
        %v930 = vunpack.c.l.b16 %v895
        %v931 = vunpack.c.h.b16 %v895
        %v932 = vunpack.c.l.b16 %v896
        %v933 = vunpack.c.h.b16 %v896
        %v934 = vunpack.c.l.b16 %v897
        %v935 = vunpack.c.h.b16 %v897
        %v936 = vunpack.c.l.b16 %v898
        %v937 = vunpack.c.h.b16 %v898
        %v938 = vunpack.c.l.b16 %v899
        %v939 = vunpack.c.h.b16 %v899
        %v940 = vunpack.c.l.b16 %v900
        %v941 = vunpack.c.h.b16 %v900
        %v942 = vunpack.c.l.b16 %v901
        %v943 = vunpack.c.h.b16 %v901
        %v944 = vunpack.c.l.b16 %v902
        %v945 = vunpack.c.h.b16 %v902
        %v946 = vunpack.c.l.b16 %v903
        %v947 = vunpack.c.h.b16 %v903
        %v948 = vunpack.c.l.b16 %v904
        %v949 = vunpack.c.h.b16 %v904
        %v950 = vunpack.c.l.b16 %v905
        %v951 = vunpack.c.h.b16 %v905
        %v952 = vunpack.c.l.b16 %v906
        %v953 = vunpack.c.h.b16 %v906
        %v954 = vunpack.c.l.b16 %v907
        %v955 = vunpack.c.h.b16 %v907
        %v956 = vpack.c.b16 %v924, %v924
        %v957 = vpack.c.b16 %v925, %v925
        %v958 = vpack.c.b16 %v926, %v926
        %v959 = vpack.c.b16 %v927, %v927
        %v960 = vpack.c.b16 %v928, %v928
        %v961 = vpack.c.b16 %v929, %v929
        %v962 = vpack.c.b16 %v930, %v930
        %v963 = vpack.c.b16 %v931, %v931
        %v964 = vpack.c.b16 %v932, %v932
        %v965 = vpack.c.b16 %v933, %v933
        %v966 = vpack.c.b16 %v934, %v934
        %v967 = vpack.c.b16 %v935, %v935
        %v968 = vpack.c.b16 %v936, %v936
        %v969 = vpack.c.b16 %v937, %v937
        %v970 = vpack.c.b16 %v938, %v938
        %v971 = vpack.c.b16 %v939, %v939
        %v972 = vpack.c.b16 %v940, %v940
        %v973 = vpack.c.b16 %v941, %v941
        %v974 = vpack.c.b16 %v942, %v942
        %v975 = vpack.c.b16 %v943, %v943
        %v976 = vpack.c.b16 %v944, %v944
        %v977 = vpack.c.b16 %v945, %v945
        %v978 = vpack.c.b16 %v946, %v946
        %v979 = vpack.c.b16 %v947, %v947
        %v980 = vpack.c.b16 %v948, %v948
        %v981 = vpack.c.b16 %v949, %v949
        %v982 = vpack.c.b16 %v950, %v950
        %v983 = vpack.c.b16 %v951, %v951
        %v984 = vpack.c.b16 %v952, %v952
        %v985 = vpack.c.b16 %v953, %v953
        %v986 = vpack.c.b16 %v954, %v954
        %v987 = vpack.c.b16 %v955, %v955
        %1020 = vst [vmem:[%s289] sm:$0xf] %v956
        %1021 = vst [vmem:[%s289 + $0x4] sm:$0xf] %v957
        %1022 = vst [vmem:[%s289 + $0x8] sm:$0xf] %v958
        %1023 = vst [vmem:[%s289 + $0xc] sm:$0xf] %v959
        %1024 = vst [vmem:[%s289 + $0x10] sm:$0xf] %v960
        %1025 = vst [vmem:[%s289 + $0x14] sm:$0xf] %v961
        %1026 = vst [vmem:[%s289 + $0x18] sm:$0xf] %v962
        %1027 = vst [vmem:[%s289 + $0x1c] sm:$0xf] %v963
        %1028 = vst [vmem:[%s289 + $0x20] sm:$0xf] %v964
        %1029 = vst [vmem:[%s289 + $0x24] sm:$0xf] %v965
        %1030 = vst [vmem:[%s289 + $0x28] sm:$0xf] %v966
        %1031 = vst [vmem:[%s289 + $0x2c] sm:$0xf] %v967
        %1032 = vst [vmem:[%s289 + $0x30] sm:$0xf] %v968
        %1033 = vst [vmem:[%s289 + $0x34] sm:$0xf] %v969
        %1034 = vst [vmem:[%s289 + $0x38] sm:$0xf] %v970
        %1035 = vst [vmem:[%s289 + $0x3c] sm:$0xf] %v971
        %1036 = vst [vmem:[%s289 + $0x40] sm:$0xf] %v972
        %1037 = vst [vmem:[%s289 + $0x44] sm:$0xf] %v973
        %1038 = vst [vmem:[%s289 + $0x48] sm:$0xf] %v974
        %1039 = vst [vmem:[%s289 + $0x4c] sm:$0xf] %v975
        %1040 = vst [vmem:[%s289 + $0x50] sm:$0xf] %v976
        %1041 = vst [vmem:[%s289 + $0x54] sm:$0xf] %v977
        %1042 = vst [vmem:[%s289 + $0x58] sm:$0xf] %v978
        %1043 = vst [vmem:[%s289 + $0x5c] sm:$0xf] %v979
        %1044 = vst [vmem:[%s289 + $0x60] sm:$0xf] %v980
        %1045 = vst [vmem:[%s289 + $0x64] sm:$0xf] %v981
        %1046 = vst [vmem:[%s289 + $0x68] sm:$0xf] %v982
        %1047 = vst [vmem:[%s289 + $0x6c] sm:$0xf] %v983
        %1048 = vst [vmem:[%s289 + $0x70] sm:$0xf] %v984
        %1049 = vst [vmem:[%s289 + $0x74] sm:$0xf] %v985
        %1050 = vst [vmem:[%s289 + $0x78] sm:$0xf] %v986
        %1051 = vst [vmem:[%s289 + $0x7c] sm:$0xf] %v987
        %s1052 = sand.u32 %s159, 1
        %s1053 = scalar_lea.sflag [#allocation4], %s1052
        %s1054 = sand.u32 %s159, 1
        %s1055 = smul.addr %s1054, 128
        %s1056 = scalar_lea.vmem [#allocation7], %s1055
        // Predicated region
        $region45: #{_fused_matmul_padded.1} parent=35 // pred_check
          %p1057 = pneg %p169
        $region46: #{_fused_matmul_padded.1} parent=35 // pred_check_branch
          %1059 = sbr.rel (%p1057) target = $region48
        $region47: #{_fused_matmul_padded.1} parent=35 // pred_region
          %s1060 = smul.u32 32, %s27
          %s1062 = ssub.s32 2048, 2048
          %1063 = vsyncadd %s1053, %s1062
          %s1064 = sadd.s32 %s28, %s1060
          %s1065 = smul.addr %s1064, 64
          %s1066 = scalar_lea.hbm %s4, %s1065
          %s1067 = sshll.u32 %s1056, 4
          %s1068 = int_to_ptr.vmem [resolvable:$true] %s1067
          %1073 = dma.vmem_to_hbm [thread:$0]  %s1068, 2048, %s1066, %s1053, 64, 64, 4
        $region48: #{_fused_matmul_padded.1} parent=35 // pred_fallthru
          _
      $region36: #{_fused_matmul_padded.1} parent=5 // pred_fallthru
        _
      %p1074 = scmp.le.s32.totalorder 2, %s17
      // Predicated region
      $region49: #{_fused_matmul_padded.1} parent=5 // pred_check
        %p1075 = pneg %p1074
      $region50: #{_fused_matmul_padded.1} parent=5 // pred_check_branch
        %1077 = sbr.rel (%p1075) target = $region52
      $region51: #{_fused_matmul_padded.1} parent=5 // pred_region
        %s1078 = ssub.s32 %s17, 2
        // Predicated region
        $region53: #{_fused_matmul_padded.1} parent=51 // pred_check
          %p1079 = pneg %p175
        $region54: #{_fused_matmul_padded.1} parent=51 // pred_check_branch
          %1081 = sbr.rel (%p1079) target = $region56
        $region55: #{_fused_matmul_padded.1} parent=51 // pred_region
          %s1082 = sand.u32 %s160, 1
          %s1083 = scalar_lea.sflag [#allocation4], %s1082
          %s1084 = sand.u32 %s160, 1
          %s1085 = smul.addr %s1084, 128
          %s1086 = scalar_lea.vmem [#allocation7], %s1085
          %1087 = dma.done %s1083, 2048
        $region56: #{_fused_matmul_padded.1} parent=51 // pred_fallthru
          _
      $region52: #{_fused_matmul_padded.1} parent=5 // pred_fallthru
        _
    $region6: #{_fused_matmul_padded.1} parent=1 // loop_footer
      %s21 = sadd.s32 1, %s17
    $region7: #{_fused_matmul_padded.1} parent=1 // loop_footer_branch
      %16 = sbr.rel target = $region3
    $region8: #{_fused_matmul_padded.1} parent=1 // loop_exit
      _
    %1088 = vsyncpa [#allocation3], 1
    %s1089 = scalar_lea.sflag [#allocation3], 1
    %1090 = vsyncpa %s1089, 1
    %1091 = vsyncpa [#allocation6], 1
    %1092 = vsyncpa [#allocation4], 1
    %s1093 = scalar_lea.sflag [#allocation4], 1
    %1094 = vsyncpa %s1093, 1

</llo_original>
